<compile_context>
chip_gen: v7x
topology: tpu7x:2x2x1
jax: 0.10.0
libtpu: 0.0.40
codegen_flags: <defaults>
</compile_context>

<pallas_src>
import functools

import jax
import jax.numpy as jnp
from jax.experimental import pallas as pl
from jax.experimental.pallas import tpu as pltpu


def _round_up(n, m):
    return ((n + m - 1) // m) * m


def _embedding_kernel(x_ref, o_ref, *, freq_bands, in_channels):
    """One batch-lane tile: x_ref is (C, L), o_ref is (C*(2N+1), L).

    Channel order along the sublane axis matches the PyTorch reference.
    """
    C = in_channels
    # Compute sin/cos in f32 (v5e EUP has no bf16 path); store in out dtype.
    x = x_ref[...].astype(jnp.float32)                 # (C, L)
    o_ref[0:C, :] = x.astype(o_ref.dtype)
    for k, f in enumerate(freq_bands):                 # static python loop; f is a constant
        xf = x * f
        s = (2 * k + 1) * C
        o_ref[s:s + C, :] = jnp.sin(xf).astype(o_ref.dtype)
        o_ref[s + C:s + 2 * C, :] = jnp.cos(xf).astype(o_ref.dtype)
    # TODO(synk): on v7x a double-angle recurrence (sin/cos once on EUP, rest
    # on VPU) would cut EUP ops ~N_freqs x; kept exact EUP sin/cos here.


class Embedding:
    """JAX/Pallas port of lib/dmpigo.py::Embedding (no learnable params)."""

    # Lane tile (batch rows per grid step). 2048 * (C + out_channels) * 4 B,
    # double-buffered, is ~0.5 MB for C=3 / out=27 — negligible vs VMEM, while
    # amortizing the ~0.35 us/grid-step overhead.
    _LANE_TILE = 2048

    def __init__(self, in_channels, N_freqs, logscale=True):
        self.in_channels = in_channels
        self.N_freqs = N_freqs
        self.out_channels = in_channels * (2 * N_freqs + 1)
        if logscale:
            fb = 2.0 ** jnp.linspace(0.0, N_freqs - 1, N_freqs)
        else:
            fb = jnp.linspace(1.0, 2.0 ** (N_freqs - 1), N_freqs)
        # Static python floats so they bake into the kernel as constants.
        self.freq_bands = tuple(float(f) for f in fb)

    def __call__(self, x):
        B, C = x.shape
        assert C == self.in_channels
        out_c = self.out_channels

        # Lane-dense layout: batch on the 128-lane axis, channels on sublanes.
        xT = jnp.transpose(x)                           # (C, B) — XLA-side plumbing

        # Tile the lane (batch) axis; pad so the grid covers it exactly.
        tile = min(self._LANE_TILE, _round_up(B, 128))
        Bpad = _round_up(B, tile)
        if Bpad != B:
            xT = jnp.pad(xT, ((0, 0), (0, Bpad - B)))
        grid = (Bpad // tile,)

        kernel = functools.partial(
            _embedding_kernel, freq_bands=self.freq_bands, in_channels=C)

        itemsize = jnp.dtype(x.dtype).itemsize
        cost = pl.CostEstimate(
            flops=Bpad * C * self.N_freqs,
            transcendentals=Bpad * C * 2 * self.N_freqs,
            bytes_accessed=Bpad * (C + out_c) * itemsize,
        )

        outT = pl.pallas_call(
            kernel,
            out_shape=jax.ShapeDtypeStruct((out_c, Bpad), x.dtype),
            grid_spec=pltpu.PrefetchScalarGridSpec(
                num_scalar_prefetch=0,
                grid=grid,
                # Second-to-last dims (C / out_c) are full-extent, last dim is
                # a multiple of 128 — satisfies the (8, 128) layout rule.
                in_specs=[pl.BlockSpec((C, tile), lambda i: (0, i))],
                out_specs=pl.BlockSpec((out_c, tile), lambda i: (0, i)),
            ),
            compiler_params=pltpu.CompilerParams(
                dimension_semantics=("parallel",),
            ),
            cost_estimate=cost,
        )(xT)

        # Drop padding and go back to (B, out_channels).
        return jnp.transpose(outT[:, :B])


def _reference(x, freq_bands):
    out = [x]
    for f in freq_bands:
        out.append(jnp.sin(f * x))
        out.append(jnp.cos(f * x))
    return jnp.concatenate(out, axis=-1)


if __name__ == "__main__":
    key = jax.random.PRNGKey(0)
    B, C, N_freqs = 16, 3, 4  # e.g. xyz coordinates with 4 frequency bands
    x = jax.random.normal(key, (B, C), dtype=jnp.float32)

    emb = Embedding(in_channels=C, N_freqs=N_freqs, logscale=True)
    out = emb(x)
    out = jax.block_until_ready(out)

    assert out.shape == (B, emb.out_channels), out.shape

    ref = _reference(x, emb.freq_bands)
    assert jnp.allclose(out, ref, atol=1e-5, rtol=1e-5), "mismatch vs reference"

    print("KERNEL_OK")
</pallas_src>

<mosaic_0001>
module attributes {stable_mosaic.version = 11 : i64} {
  func.func @_embedding_kernel(%arg0: i32, %arg1: memref<3x128xf32, #tpu.memory_space<vmem>>, %arg2: memref<27x128xf32, #tpu.memory_space<vmem>>) attributes {dimension_semantics = [#tpu.dimension_semantics<parallel>], iteration_bounds = array<i64: 1>, scalar_prefetch = 0 : i64, scratch_operands = 0 : i64, tpu.core_type = #tpu.core_type<tc>, window_params = [{transform_indices = @transform_0, window_bounds = array<i64: 3, 128>}, {transform_indices = @transform_1, window_bounds = array<i64: 27, 128>}]} {
    %c0 = arith.constant 0 : index
    %c0_0 = arith.constant 0 : index
    %0 = vector.load %arg1[%c0, %c0_0] : memref<3x128xf32, #tpu.memory_space<vmem>>, vector<3x128xf32>
    %c0_1 = arith.constant 0 : index
    %c0_2 = arith.constant 0 : index
    %1 = vector.load %arg2[%c0_1, %c0_2] : memref<27x128xf32, #tpu.memory_space<vmem>>, vector<3x128xf32>
    tpu.vector_store %arg2[%c0_1, %c0_2], %0 {strides = array<i32>} : memref<27x128xf32, #tpu.memory_space<vmem>>, vector<3x128xf32>,
    %cst = arith.constant 1.000000e+00 : f32
    %2 = vector.broadcast %cst : f32 to vector<3x128xf32>
    %3 = arith.mulf %0, %2 : vector<3x128xf32>
    %4 = math.sin %3 : vector<3x128xf32>
    %c3 = arith.constant 3 : index
    %c0_3 = arith.constant 0 : index
    %5 = vector.load %arg2[%c3, %c0_3] : memref<27x128xf32, #tpu.memory_space<vmem>>, vector<3x128xf32>
    tpu.vector_store %arg2[%c3, %c0_3], %4 {strides = array<i32>} : memref<27x128xf32, #tpu.memory_space<vmem>>, vector<3x128xf32>,
    %6 = math.cos %3 : vector<3x128xf32>
    %c6 = arith.constant 6 : index
    %c0_4 = arith.constant 0 : index
    %7 = vector.load %arg2[%c6, %c0_4] : memref<27x128xf32, #tpu.memory_space<vmem>>, vector<3x128xf32>
    tpu.vector_store %arg2[%c6, %c0_4], %6 {strides = array<i32>} : memref<27x128xf32, #tpu.memory_space<vmem>>, vector<3x128xf32>,
    %cst_5 = arith.constant 2.000000e+00 : f32
    %8 = vector.broadcast %cst_5 : f32 to vector<3x128xf32>
    %9 = arith.mulf %0, %8 : vector<3x128xf32>
    %10 = math.sin %9 : vector<3x128xf32>
    %c9 = arith.constant 9 : index
    %c0_6 = arith.constant 0 : index
    %11 = vector.load %arg2[%c9, %c0_6] : memref<27x128xf32, #tpu.memory_space<vmem>>, vector<3x128xf32>
    tpu.vector_store %arg2[%c9, %c0_6], %10 {strides = array<i32>} : memref<27x128xf32, #tpu.memory_space<vmem>>, vector<3x128xf32>,
    %12 = math.cos %9 : vector<3x128xf32>
    %c12 = arith.constant 12 : index
    %c0_7 = arith.constant 0 : index
    %13 = vector.load %arg2[%c12, %c0_7] : memref<27x128xf32, #tpu.memory_space<vmem>>, vector<3x128xf32>
    tpu.vector_store %arg2[%c12, %c0_7], %12 {strides = array<i32>} : memref<27x128xf32, #tpu.memory_space<vmem>>, vector<3x128xf32>,
    %cst_8 = arith.constant 4.000000e+00 : f32
    %14 = vector.broadcast %cst_8 : f32 to vector<3x128xf32>
    %15 = arith.mulf %0, %14 : vector<3x128xf32>
    %16 = math.sin %15 : vector<3x128xf32>
    %c15 = arith.constant 15 : index
    %c0_9 = arith.constant 0 : index
    %17 = vector.load %arg2[%c15, %c0_9] : memref<27x128xf32, #tpu.memory_space<vmem>>, vector<3x128xf32>
    tpu.vector_store %arg2[%c15, %c0_9], %16 {strides = array<i32>} : memref<27x128xf32, #tpu.memory_space<vmem>>, vector<3x128xf32>,
    %18 = math.cos %15 : vector<3x128xf32>
    %c18 = arith.constant 18 : index
    %c0_10 = arith.constant 0 : index
    %19 = vector.load %arg2[%c18, %c0_10] : memref<27x128xf32, #tpu.memory_space<vmem>>, vector<3x128xf32>
    tpu.vector_store %arg2[%c18, %c0_10], %18 {strides = array<i32>} : memref<27x128xf32, #tpu.memory_space<vmem>>, vector<3x128xf32>,
    %cst_11 = arith.constant 8.000000e+00 : f32
    %20 = vector.broadcast %cst_11 : f32 to vector<3x128xf32>
    %21 = arith.mulf %0, %20 : vector<3x128xf32>
    %22 = math.sin %21 : vector<3x128xf32>
    %c21 = arith.constant 21 : index
    %c0_12 = arith.constant 0 : index
    %23 = vector.load %arg2[%c21, %c0_12] : memref<27x128xf32, #tpu.memory_space<vmem>>, vector<3x128xf32>
    tpu.vector_store %arg2[%c21, %c0_12], %22 {strides = array<i32>} : memref<27x128xf32, #tpu.memory_space<vmem>>, vector<3x128xf32>,
    %24 = math.cos %21 : vector<3x128xf32>
    %c24 = arith.constant 24 : index
    %c0_13 = arith.constant 0 : index
    %25 = vector.load %arg2[%c24, %c0_13] : memref<27x128xf32, #tpu.memory_space<vmem>>, vector<3x128xf32>
    tpu.vector_store %arg2[%c24, %c0_13], %24 {strides = array<i32>} : memref<27x128xf32, #tpu.memory_space<vmem>>, vector<3x128xf32>,
    return
  }
  func.func @transform_0(%arg0: i32) -> (i32, i32) {
    %c0_i32 = arith.constant 0 : i32
    %c0_i32_0 = arith.constant 0 : i32
    return %c0_i32, %arg0 : i32, i32
  }
  func.func @transform_1(%arg0: i32) -> (i32, i32) {
    %c0_i32 = arith.constant 0 : i32
    %c0_i32_0 = arith.constant 0 : i32
    return %c0_i32, %arg0 : i32, i32
  }
}

</mosaic_0001>

<llo_original>
// kernel: tpu_custom_call.1
$region0: #{tpu_custom_call.1}
  #allocation0 [shape = 'u32[]', space=smem, size = 0x4, offset = 0x4, fixed_abs, tag = 'smem constant byte address 0x4 - core index']
  #allocation1 [shape = 'u32[144,128]{1,0:T(1,128)}', space=vmem, size = 0x12000, scoped, tag = 'internal scratch']
  %s0 = inlined_call_operand.hbm [shape: f32[3,128], index: 0, kind: input, shape index: {}]
  %s1 = inlined_call_operand.hbm [shape: f32[27,128], index: 1, kind: output, shape index: {}]
  %s2 = sld [smem:[#allocation0]]
  $region18: #{tpu_custom_call.1} parent=0
    _
  %s4 = ssub.s32 1, %s2
  %s5 = scalar_select 0, %s4, %s2
  $region1: #{tpu_custom_call.1} parent=0
    #allocation2 [shape = 'u8[2048]{0}', space=vmem, size = 0x800, scoped, tag = 'input window, operand 0, single buffered']
    #allocation3 [shape = 's32[1]{0}', space=sflag, size = 0x4, scoped, tag = 'scoped memory for tpu_custom_call.1']
    #allocation4 [shape = 's32[1]{0}', space=sflag, size = 0x4, scoped, tag = 'scoped memory for tpu_custom_call.1']
    #allocation5 [shape = 'u8[16384]{0}', space=vmem, size = 0x4000, scoped, tag = 'output window, operand 0, single buffered']
    %6 = vsyncpa [#allocation3], 0
    %7 = vsyncpa [#allocation4], 0
    // Predicated region
    $region2: #{tpu_custom_call.1} parent=1 // pred_check
      _
    $region3: #{tpu_custom_call.1} parent=1 // pred_check_branch
      %9 = sbr.rel (0) target = $region5
    $region4: #{tpu_custom_call.1} parent=1 // pred_region
      %s11 = ssub.s32 64, 64
      %12 = vsyncadd [#allocation3], %s11
      %s14 = sshll.u32 [#allocation2], 4
      %s15 = int_to_ptr.vmem [resolvable:$true] %s14
      %17 = dma.hbm_to_vmem [thread:$0]  %s0, 64, %s15, [#allocation3]
    $region5: #{tpu_custom_call.1} parent=1 // pred_fallthru
      _
    // Predicated region
    $region6: #{tpu_custom_call.1} parent=1 // pred_check
      _
    $region7: #{tpu_custom_call.1} parent=1 // pred_check_branch
      %19 = sbr.rel (0) target = $region9
    $region8: #{tpu_custom_call.1} parent=1 // pred_region
      %20 = dma.done [#allocation3], 64
    $region9: #{tpu_custom_call.1} parent=1 // pred_fallthru
      _
    %v21 = vld [vmem:[#allocation2] sm:$0x7]
    %22 = vst [vmem:[#allocation5] sm:$0x7] %v21
    %v23 = vand.u32 2147483647, %v21
    %vm24 = vcmp.le.f32.partialorder %v23, 0.7853982
    %vm25 = vcmp.lt.s32.totalorder %v21, 0
    %v26 = vand.u32 %v21, 2139095040
    %v27 = vshrl.u32 %v26, 23
    %v28 = vsub.s32 %v27, 127
    %v29 = vand.u32 2147483647, %v21
    %v30 = vand.u32 %v29, 8388607
    %v31 = vor.u32 %v30, 8388608
    %v32 = vsub.s32 0, %v31
    %v33 = vadd.s32 %v28, 1
    %vm34 = vcmp.gt.s32.totalorder %v33, 0
    %v35 = vsel %vm34, %v33, 0
    %v36 = vshrl.u32 %v35, 5
    %v37 = vand.u32 %v35, 31
    %v38 = vsub.s32 32, %v37
    %v39 = vshrl.u32 683565275, %v38
    %v40 = vshll.u32 683565275, %v37
    %v41 = vshrl.u32 2475754826, %v38
    %v42 = vor.u32 %v40, %v41
    %v43 = vshll.u32 2475754826, %v37
    %v44 = vshrl.u32 2131351028, %v38
    %v45 = vor.u32 %v43, %v44
    %v46 = vshll.u32 2131351028, %v37
    %v47 = vshrl.u32 2102212464, %v38
    %v48 = vor.u32 %v46, %v47
    %v49 = vshll.u32 2102212464, %v37
    %v50 = vshrl.u32 920167782, %v38
    %v51 = vor.u32 %v49, %v50
    %v52 = vshll.u32 920167782, %v37
    %v53 = vshrl.u32 1326507024, %v38
    %v54 = vor.u32 %v52, %v53
    %vm55 = vcmp.lt.s32.totalorder %v36, 1
    %vm56 = vcmp.lt.s32.totalorder %v36, 2
    %vm57 = vcmp.lt.s32.totalorder %v36, 3
    %vm58 = vcmp.lt.s32.totalorder %v36, 4
    %v59 = vsel %vm55, %v39, %v42
    %v60 = vsel %vm58, %v48, 2102212464
    %v61 = vsel %vm57, %v45, %v60
    %v62 = vsel %vm56, %v59, %v61
    %v63 = vsel %vm55, %v42, %v45
    %v64 = vsel %vm58, %v51, 920167782
    %v65 = vsel %vm57, %v48, %v64
    %v66 = vsel %vm56, %v63, %v65
    %v67 = vsel %vm55, %v45, %v48
    %v68 = vsel %vm58, %v54, 1326507024
    %v69 = vsel %vm57, %v51, %v68
    %v70 = vsel %vm56, %v67, %v69
    %v71 = vshll.u32 %v31, 8
    %v72 = vmul.u32.u64.compose %v71, %v70
    %v73 = vextract.low.u32 %v72
    %v74 = vextract.high.u32 %v72
    %v75 = vmul.u32.u64.compose %v71, %v66
    %v76 = vextract.low.u32 %v75
    %v77 = vextract.high.u32 %v75
    %v78 = vmul.u32 %v71, %v62
    %v79 = vadd.s32 %v74, %v76
    %vm80 = vc.u32 %v74, %v76
    %v81 = vadd.s32 %v77, 1
    %v82 = vsel %vm80, %v81, %v77
    %v83 = vadd.s32 %v78, %v82
    %v84 = vadd.s32 %v83, 536870912
    %v85 = vshrl.u32 %v84, 30
    %v86 = vshll.u32 %v85, 30
    %v87 = vsub.s32 %v83, %v86
    %vm88 = vcmp.lt.s32.totalorder %v87, 0
    %v89 = vsub.s32 0, %v87
    %v90 = vsel %vm88, %v89, %v87
    %v91 = vclz %v90
    %v92 = vsub.s32 %v91, 2
    %vm93 = vcmp.gt.s32.totalorder 0, %v92
    %v94 = vsel %vm93, 0, %v92
    %v95 = vsub.s32 32, %v94
    %v96 = vshll.u32 %v87, %v94
    %v97 = vshrl.u32 %v79, %v95
    %v98 = vor.u32 %v96, %v97
    %v99 = vsub.s32 4294967266, %v94
    %v100 = vadd.s32 %v99, 127
    %v101 = vshll.u32 %v100, 23
    %v102 = vor.u32 4788187, %v101
    %v103 = vand.u32 2147483647, %v102
    %v105 = vcvt.s32.f32 %v98
    %v106 = vmul.f32 %v105, %v103
    %v107 = vxor.u32 %v106, 2147483648
    %v108 = vsel %vm25, %v107, %v106
    %v109 = vsub.s32 4, %v85
    %v110 = vsel %vm25, %v109, %v85
    %v111 = vsel %vm24, %v21, %v108
    %v112 = vsel %vm24, 0, %v110
    %v113 = vcosq.f32.pop %v111
    %v114 = vsinq.f32.pop %v111
    %vm115 = vweird.f32 %v21
    %v116 = vadd.s32 %v112, 3
    %v117 = vand.u32 %v116, 3
    %vm118 = vcmp.lt.s32.totalorder %v117, 2
    %vm119 = vcmp.eq.s32.totalorder %v117, 0
    %v120 = vxor.u32 %v114, 2147483648
    %v121 = vsel %vm119, %v113, %v120
    %vm122 = vcmp.eq.s32.totalorder %v117, 2
    %v123 = vxor.u32 %v113, 2147483648
    %v124 = vsel %vm122, %v123, %v114
    %v125 = vsel %vm118, %v121, %v124
    %v126 = vsel %vm115, nan, %v125
    %127 = vst [vmem:[#allocation5 + $0x3] sm:$0x7] %v126
    %v128 = vand.u32 2147483647, %v21
    %vm129 = vcmp.le.f32.partialorder %v128, 0.7853982
    %vm130 = vcmp.lt.s32.totalorder %v21, 0
    %v131 = vand.u32 %v21, 2139095040
    %v132 = vshrl.u32 %v131, 23
    %v133 = vsub.s32 %v132, 127
    %v134 = vand.u32 2147483647, %v21
    %v135 = vand.u32 %v134, 8388607
    %v136 = vor.u32 %v135, 8388608
    %v137 = vsub.s32 0, %v136
    %v138 = vadd.s32 %v133, 1
    %vm139 = vcmp.gt.s32.totalorder %v138, 0
    %v140 = vsel %vm139, %v138, 0
    %v141 = vshrl.u32 %v140, 5
    %v142 = vand.u32 %v140, 31
    %v143 = vsub.s32 32, %v142
    %v144 = vshrl.u32 683565275, %v143
    %v145 = vshll.u32 683565275, %v142
    %v146 = vshrl.u32 2475754826, %v143
    %v147 = vor.u32 %v145, %v146
    %v148 = vshll.u32 2475754826, %v142
    %v149 = vshrl.u32 2131351028, %v143
    %v150 = vor.u32 %v148, %v149
    %v151 = vshll.u32 2131351028, %v142
    %v152 = vshrl.u32 2102212464, %v143
    %v153 = vor.u32 %v151, %v152
    %v154 = vshll.u32 2102212464, %v142
    %v155 = vshrl.u32 920167782, %v143
    %v156 = vor.u32 %v154, %v155
    %v157 = vshll.u32 920167782, %v142
    %v158 = vshrl.u32 1326507024, %v143
    %v159 = vor.u32 %v157, %v158
    %vm160 = vcmp.lt.s32.totalorder %v141, 1
    %vm161 = vcmp.lt.s32.totalorder %v141, 2
    %vm162 = vcmp.lt.s32.totalorder %v141, 3
    %vm163 = vcmp.lt.s32.totalorder %v141, 4
    %v164 = vsel %vm160, %v144, %v147
    %v165 = vsel %vm163, %v153, 2102212464
    %v166 = vsel %vm162, %v150, %v165
    %v167 = vsel %vm161, %v164, %v166
    %v168 = vsel %vm160, %v147, %v150
    %v169 = vsel %vm163, %v156, 920167782
    %v170 = vsel %vm162, %v153, %v169
    %v171 = vsel %vm161, %v168, %v170
    %v172 = vsel %vm160, %v150, %v153
    %v173 = vsel %vm163, %v159, 1326507024
    %v174 = vsel %vm162, %v156, %v173
    %v175 = vsel %vm161, %v172, %v174
    %v176 = vshll.u32 %v136, 8
    %v177 = vmul.u32.u64.compose %v176, %v175
    %v178 = vextract.low.u32 %v177
    %v179 = vextract.high.u32 %v177
    %v180 = vmul.u32.u64.compose %v176, %v171
    %v181 = vextract.low.u32 %v180
    %v182 = vextract.high.u32 %v180
    %v183 = vmul.u32 %v176, %v167
    %v184 = vadd.s32 %v179, %v181
    %vm185 = vc.u32 %v179, %v181
    %v186 = vadd.s32 %v182, 1
    %v187 = vsel %vm185, %v186, %v182
    %v188 = vadd.s32 %v183, %v187
    %v189 = vadd.s32 %v188, 536870912
    %v190 = vshrl.u32 %v189, 30
    %v191 = vshll.u32 %v190, 30
    %v192 = vsub.s32 %v188, %v191
    %vm193 = vcmp.lt.s32.totalorder %v192, 0
    %v194 = vsub.s32 0, %v192
    %v195 = vsel %vm193, %v194, %v192
    %v196 = vclz %v195
    %v197 = vsub.s32 %v196, 2
    %vm198 = vcmp.gt.s32.totalorder 0, %v197
    %v199 = vsel %vm198, 0, %v197
    %v200 = vsub.s32 32, %v199
    %v201 = vshll.u32 %v192, %v199
    %v202 = vshrl.u32 %v184, %v200
    %v203 = vor.u32 %v201, %v202
    %v204 = vsub.s32 4294967266, %v199
    %v205 = vadd.s32 %v204, 127
    %v206 = vshll.u32 %v205, 23
    %v207 = vor.u32 4788187, %v206
    %v208 = vand.u32 2147483647, %v207
    %v210 = vcvt.s32.f32 %v203
    %v211 = vmul.f32 %v210, %v208
    %v212 = vxor.u32 %v211, 2147483648
    %v213 = vsel %vm130, %v212, %v211
    %v214 = vsub.s32 4, %v190
    %v215 = vsel %vm130, %v214, %v190
    %v216 = vsel %vm129, %v21, %v213
    %v217 = vsel %vm129, 0, %v215
    %v218 = vcosq.f32.pop %v216
    %v219 = vsinq.f32.pop %v216
    %vm220 = vweird.f32 %v21
    %v221 = vand.u32 %v217, 3
    %vm222 = vcmp.lt.s32.totalorder %v221, 2
    %vm223 = vcmp.eq.s32.totalorder %v221, 0
    %v224 = vxor.u32 %v219, 2147483648
    %v225 = vsel %vm223, %v218, %v224
    %vm226 = vcmp.eq.s32.totalorder %v221, 2
    %v227 = vxor.u32 %v218, 2147483648
    %v228 = vsel %vm226, %v227, %v219
    %v229 = vsel %vm222, %v225, %v228
    %v230 = vsel %vm220, nan, %v229
    %231 = vst [vmem:[#allocation5 + $0x6] sm:$0x7] %v230
    %v232 = vmul.f32 %v21, 2.0
    %v233 = vand.u32 2147483647, %v232
    %vm234 = vcmp.le.f32.partialorder %v233, 0.7853982
    %vm235 = vcmp.lt.s32.totalorder %v232, 0
    %v236 = vand.u32 %v232, 2139095040
    %v237 = vshrl.u32 %v236, 23
    %v238 = vsub.s32 %v237, 127
    %v239 = vand.u32 2147483647, %v232
    %v240 = vand.u32 %v239, 8388607
    %v241 = vor.u32 %v240, 8388608
    %v242 = vsub.s32 0, %v241
    %v243 = vadd.s32 %v238, 1
    %vm244 = vcmp.gt.s32.totalorder %v243, 0
    %v245 = vsel %vm244, %v243, 0
    %v246 = vshrl.u32 %v245, 5
    %v247 = vand.u32 %v245, 31
    %v248 = vsub.s32 32, %v247
    %v249 = vshrl.u32 683565275, %v248
    %v250 = vshll.u32 683565275, %v247
    %v251 = vshrl.u32 2475754826, %v248
    %v252 = vor.u32 %v250, %v251
    %v253 = vshll.u32 2475754826, %v247
    %v254 = vshrl.u32 2131351028, %v248
    %v255 = vor.u32 %v253, %v254
    %v256 = vshll.u32 2131351028, %v247
    %v257 = vshrl.u32 2102212464, %v248
    %v258 = vor.u32 %v256, %v257
    %v259 = vshll.u32 2102212464, %v247
    %v260 = vshrl.u32 920167782, %v248
    %v261 = vor.u32 %v259, %v260
    %v262 = vshll.u32 920167782, %v247
    %v263 = vshrl.u32 1326507024, %v248
    %v264 = vor.u32 %v262, %v263
    %vm265 = vcmp.lt.s32.totalorder %v246, 1
    %vm266 = vcmp.lt.s32.totalorder %v246, 2
    %vm267 = vcmp.lt.s32.totalorder %v246, 3
    %vm268 = vcmp.lt.s32.totalorder %v246, 4
    %v269 = vsel %vm265, %v249, %v252
    %v270 = vsel %vm268, %v258, 2102212464
    %v271 = vsel %vm267, %v255, %v270
    %v272 = vsel %vm266, %v269, %v271
    %v273 = vsel %vm265, %v252, %v255
    %v274 = vsel %vm268, %v261, 920167782
    %v275 = vsel %vm267, %v258, %v274
    %v276 = vsel %vm266, %v273, %v275
    %v277 = vsel %vm265, %v255, %v258
    %v278 = vsel %vm268, %v264, 1326507024
    %v279 = vsel %vm267, %v261, %v278
    %v280 = vsel %vm266, %v277, %v279
    %v281 = vshll.u32 %v241, 8
    %v282 = vmul.u32.u64.compose %v281, %v280
    %v283 = vextract.low.u32 %v282
    %v284 = vextract.high.u32 %v282
    %v285 = vmul.u32.u64.compose %v281, %v276
    %v286 = vextract.low.u32 %v285
    %v287 = vextract.high.u32 %v285
    %v288 = vmul.u32 %v281, %v272
    %v289 = vadd.s32 %v284, %v286
    %vm290 = vc.u32 %v284, %v286
    %v291 = vadd.s32 %v287, 1
    %v292 = vsel %vm290, %v291, %v287
    %v293 = vadd.s32 %v288, %v292
    %v294 = vadd.s32 %v293, 536870912
    %v295 = vshrl.u32 %v294, 30
    %v296 = vshll.u32 %v295, 30
    %v297 = vsub.s32 %v293, %v296
    %vm298 = vcmp.lt.s32.totalorder %v297, 0
    %v299 = vsub.s32 0, %v297
    %v300 = vsel %vm298, %v299, %v297
    %v301 = vclz %v300
    %v302 = vsub.s32 %v301, 2
    %vm303 = vcmp.gt.s32.totalorder 0, %v302
    %v304 = vsel %vm303, 0, %v302
    %v305 = vsub.s32 32, %v304
    %v306 = vshll.u32 %v297, %v304
    %v307 = vshrl.u32 %v289, %v305
    %v308 = vor.u32 %v306, %v307
    %v309 = vsub.s32 4294967266, %v304
    %v310 = vadd.s32 %v309, 127
    %v311 = vshll.u32 %v310, 23
    %v312 = vor.u32 4788187, %v311
    %v313 = vand.u32 2147483647, %v312
    %v315 = vcvt.s32.f32 %v308
    %v316 = vmul.f32 %v315, %v313
    %v317 = vxor.u32 %v316, 2147483648
    %v318 = vsel %vm235, %v317, %v316
    %v319 = vsub.s32 4, %v295
    %v320 = vsel %vm235, %v319, %v295
    %v321 = vsel %vm234, %v232, %v318
    %v322 = vsel %vm234, 0, %v320
    %v323 = vcosq.f32.pop %v321
    %v324 = vsinq.f32.pop %v321
    %vm325 = vweird.f32 %v232
    %v326 = vadd.s32 %v322, 3
    %v327 = vand.u32 %v326, 3
    %vm328 = vcmp.lt.s32.totalorder %v327, 2
    %vm329 = vcmp.eq.s32.totalorder %v327, 0
    %v330 = vxor.u32 %v324, 2147483648
    %v331 = vsel %vm329, %v323, %v330
    %vm332 = vcmp.eq.s32.totalorder %v327, 2
    %v333 = vxor.u32 %v323, 2147483648
    %v334 = vsel %vm332, %v333, %v324
    %v335 = vsel %vm328, %v331, %v334
    %v336 = vsel %vm325, nan, %v335
    %337 = vst [vmem:[#allocation5 + $0x9] sm:$0x7] %v336
    %v338 = vand.u32 2147483647, %v232
    %vm339 = vcmp.le.f32.partialorder %v338, 0.7853982
    %vm340 = vcmp.lt.s32.totalorder %v232, 0
    %v341 = vand.u32 %v232, 2139095040
    %v342 = vshrl.u32 %v341, 23
    %v343 = vsub.s32 %v342, 127
    %v344 = vand.u32 2147483647, %v232
    %v345 = vand.u32 %v344, 8388607
    %v346 = vor.u32 %v345, 8388608
    %v347 = vsub.s32 0, %v346
    %v348 = vadd.s32 %v343, 1
    %vm349 = vcmp.gt.s32.totalorder %v348, 0
    %v350 = vsel %vm349, %v348, 0
    %v351 = vshrl.u32 %v350, 5
    %v352 = vand.u32 %v350, 31
    %v353 = vsub.s32 32, %v352
    %v354 = vshrl.u32 683565275, %v353
    %v355 = vshll.u32 683565275, %v352
    %v356 = vshrl.u32 2475754826, %v353
    %v357 = vor.u32 %v355, %v356
    %v358 = vshll.u32 2475754826, %v352
    %v359 = vshrl.u32 2131351028, %v353
    %v360 = vor.u32 %v358, %v359
    %v361 = vshll.u32 2131351028, %v352
    %v362 = vshrl.u32 2102212464, %v353
    %v363 = vor.u32 %v361, %v362
    %v364 = vshll.u32 2102212464, %v352
    %v365 = vshrl.u32 920167782, %v353
    %v366 = vor.u32 %v364, %v365
    %v367 = vshll.u32 920167782, %v352
    %v368 = vshrl.u32 1326507024, %v353
    %v369 = vor.u32 %v367, %v368
    %vm370 = vcmp.lt.s32.totalorder %v351, 1
    %vm371 = vcmp.lt.s32.totalorder %v351, 2
    %vm372 = vcmp.lt.s32.totalorder %v351, 3
    %vm373 = vcmp.lt.s32.totalorder %v351, 4
    %v374 = vsel %vm370, %v354, %v357
    %v375 = vsel %vm373, %v363, 2102212464
    %v376 = vsel %vm372, %v360, %v375
    %v377 = vsel %vm371, %v374, %v376
    %v378 = vsel %vm370, %v357, %v360
    %v379 = vsel %vm373, %v366, 920167782
    %v380 = vsel %vm372, %v363, %v379
    %v381 = vsel %vm371, %v378, %v380
    %v382 = vsel %vm370, %v360, %v363
    %v383 = vsel %vm373, %v369, 1326507024
    %v384 = vsel %vm372, %v366, %v383
    %v385 = vsel %vm371, %v382, %v384
    %v386 = vshll.u32 %v346, 8
    %v387 = vmul.u32.u64.compose %v386, %v385
    %v388 = vextract.low.u32 %v387
    %v389 = vextract.high.u32 %v387
    %v390 = vmul.u32.u64.compose %v386, %v381
    %v391 = vextract.low.u32 %v390
    %v392 = vextract.high.u32 %v390
    %v393 = vmul.u32 %v386, %v377
    %v394 = vadd.s32 %v389, %v391
    %vm395 = vc.u32 %v389, %v391
    %v396 = vadd.s32 %v392, 1
    %v397 = vsel %vm395, %v396, %v392
    %v398 = vadd.s32 %v393, %v397
    %v399 = vadd.s32 %v398, 536870912
    %v400 = vshrl.u32 %v399, 30
    %v401 = vshll.u32 %v400, 30
    %v402 = vsub.s32 %v398, %v401
    %vm403 = vcmp.lt.s32.totalorder %v402, 0
    %v404 = vsub.s32 0, %v402
    %v405 = vsel %vm403, %v404, %v402
    %v406 = vclz %v405
    %v407 = vsub.s32 %v406, 2
    %vm408 = vcmp.gt.s32.totalorder 0, %v407
    %v409 = vsel %vm408, 0, %v407
    %v410 = vsub.s32 32, %v409
    %v411 = vshll.u32 %v402, %v409
    %v412 = vshrl.u32 %v394, %v410
    %v413 = vor.u32 %v411, %v412
    %v414 = vsub.s32 4294967266, %v409
    %v415 = vadd.s32 %v414, 127
    %v416 = vshll.u32 %v415, 23
    %v417 = vor.u32 4788187, %v416
    %v418 = vand.u32 2147483647, %v417
    %v420 = vcvt.s32.f32 %v413
    %v421 = vmul.f32 %v420, %v418
    %v422 = vxor.u32 %v421, 2147483648
    %v423 = vsel %vm340, %v422, %v421
    %v424 = vsub.s32 4, %v400
    %v425 = vsel %vm340, %v424, %v400
    %v426 = vsel %vm339, %v232, %v423
    %v427 = vsel %vm339, 0, %v425
    %v428 = vcosq.f32.pop %v426
    %v429 = vsinq.f32.pop %v426
    %vm430 = vweird.f32 %v232
    %v431 = vand.u32 %v427, 3
    %vm432 = vcmp.lt.s32.totalorder %v431, 2
    %vm433 = vcmp.eq.s32.totalorder %v431, 0
    %v434 = vxor.u32 %v429, 2147483648
    %v435 = vsel %vm433, %v428, %v434
    %vm436 = vcmp.eq.s32.totalorder %v431, 2
    %v437 = vxor.u32 %v428, 2147483648
    %v438 = vsel %vm436, %v437, %v429
    %v439 = vsel %vm432, %v435, %v438
    %v440 = vsel %vm430, nan, %v439
    %441 = vst [vmem:[#allocation5 + $0xc] sm:$0x7] %v440
    %v442 = vmul.f32 %v21, 4.0
    %v443 = vand.u32 2147483647, %v442
    %vm444 = vcmp.le.f32.partialorder %v443, 0.7853982
    %vm445 = vcmp.lt.s32.totalorder %v442, 0
    %v446 = vand.u32 %v442, 2139095040
    %v447 = vshrl.u32 %v446, 23
    %v448 = vsub.s32 %v447, 127
    %v449 = vand.u32 2147483647, %v442
    %v450 = vand.u32 %v449, 8388607
    %v451 = vor.u32 %v450, 8388608
    %v452 = vsub.s32 0, %v451
    %v453 = vadd.s32 %v448, 1
    %vm454 = vcmp.gt.s32.totalorder %v453, 0
    %v455 = vsel %vm454, %v453, 0
    %v456 = vshrl.u32 %v455, 5
    %v457 = vand.u32 %v455, 31
    %v458 = vsub.s32 32, %v457
    %v459 = vshrl.u32 683565275, %v458
    %v460 = vshll.u32 683565275, %v457
    %v461 = vshrl.u32 2475754826, %v458
    %v462 = vor.u32 %v460, %v461
    %v463 = vshll.u32 2475754826, %v457
    %v464 = vshrl.u32 2131351028, %v458
    %v465 = vor.u32 %v463, %v464
    %v466 = vshll.u32 2131351028, %v457
    %v467 = vshrl.u32 2102212464, %v458
    %v468 = vor.u32 %v466, %v467
    %v469 = vshll.u32 2102212464, %v457
    %v470 = vshrl.u32 920167782, %v458
    %v471 = vor.u32 %v469, %v470
    %v472 = vshll.u32 920167782, %v457
    %v473 = vshrl.u32 1326507024, %v458
    %v474 = vor.u32 %v472, %v473
    %vm475 = vcmp.lt.s32.totalorder %v456, 1
    %vm476 = vcmp.lt.s32.totalorder %v456, 2
    %vm477 = vcmp.lt.s32.totalorder %v456, 3
    %vm478 = vcmp.lt.s32.totalorder %v456, 4
    %v479 = vsel %vm475, %v459, %v462
    %v480 = vsel %vm478, %v468, 2102212464
    %v481 = vsel %vm477, %v465, %v480
    %v482 = vsel %vm476, %v479, %v481
    %v483 = vsel %vm475, %v462, %v465
    %v484 = vsel %vm478, %v471, 920167782
    %v485 = vsel %vm477, %v468, %v484
    %v486 = vsel %vm476, %v483, %v485
    %v487 = vsel %vm475, %v465, %v468
    %v488 = vsel %vm478, %v474, 1326507024
    %v489 = vsel %vm477, %v471, %v488
    %v490 = vsel %vm476, %v487, %v489
    %v491 = vshll.u32 %v451, 8
    %v492 = vmul.u32.u64.compose %v491, %v490
    %v493 = vextract.low.u32 %v492
    %v494 = vextract.high.u32 %v492
    %v495 = vmul.u32.u64.compose %v491, %v486
    %v496 = vextract.low.u32 %v495
    %v497 = vextract.high.u32 %v495
    %v498 = vmul.u32 %v491, %v482
    %v499 = vadd.s32 %v494, %v496
    %vm500 = vc.u32 %v494, %v496
    %v501 = vadd.s32 %v497, 1
    %v502 = vsel %vm500, %v501, %v497
    %v503 = vadd.s32 %v498, %v502
    %v504 = vadd.s32 %v503, 536870912
    %v505 = vshrl.u32 %v504, 30
    %v506 = vshll.u32 %v505, 30
    %v507 = vsub.s32 %v503, %v506
    %vm508 = vcmp.lt.s32.totalorder %v507, 0
    %v509 = vsub.s32 0, %v507
    %v510 = vsel %vm508, %v509, %v507
    %v511 = vclz %v510
    %v512 = vsub.s32 %v511, 2
    %vm513 = vcmp.gt.s32.totalorder 0, %v512
    %v514 = vsel %vm513, 0, %v512
    %v515 = vsub.s32 32, %v514
    %v516 = vshll.u32 %v507, %v514
    %v517 = vshrl.u32 %v499, %v515
    %v518 = vor.u32 %v516, %v517
    %v519 = vsub.s32 4294967266, %v514
    %v520 = vadd.s32 %v519, 127
    %v521 = vshll.u32 %v520, 23
    %v522 = vor.u32 4788187, %v521
    %v523 = vand.u32 2147483647, %v522
    %v525 = vcvt.s32.f32 %v518
    %v526 = vmul.f32 %v525, %v523
    %v527 = vxor.u32 %v526, 2147483648
    %v528 = vsel %vm445, %v527, %v526
    %v529 = vsub.s32 4, %v505
    %v530 = vsel %vm445, %v529, %v505
    %v531 = vsel %vm444, %v442, %v528
    %v532 = vsel %vm444, 0, %v530
    %v533 = vcosq.f32.pop %v531
    %v534 = vsinq.f32.pop %v531
    %vm535 = vweird.f32 %v442
    %v536 = vadd.s32 %v532, 3
    %v537 = vand.u32 %v536, 3
    %vm538 = vcmp.lt.s32.totalorder %v537, 2
    %vm539 = vcmp.eq.s32.totalorder %v537, 0
    %v540 = vxor.u32 %v534, 2147483648
    %v541 = vsel %vm539, %v533, %v540
    %vm542 = vcmp.eq.s32.totalorder %v537, 2
    %v543 = vxor.u32 %v533, 2147483648
    %v544 = vsel %vm542, %v543, %v534
    %v545 = vsel %vm538, %v541, %v544
    %v546 = vsel %vm535, nan, %v545
    %547 = vst [vmem:[#allocation5 + $0xf] sm:$0x7] %v546
    %v548 = vand.u32 2147483647, %v442
    %vm549 = vcmp.le.f32.partialorder %v548, 0.7853982
    %vm550 = vcmp.lt.s32.totalorder %v442, 0
    %v551 = vand.u32 %v442, 2139095040
    %v552 = vshrl.u32 %v551, 23
    %v553 = vsub.s32 %v552, 127
    %v554 = vand.u32 2147483647, %v442
    %v555 = vand.u32 %v554, 8388607
    %v556 = vor.u32 %v555, 8388608
    %v557 = vsub.s32 0, %v556
    %v558 = vadd.s32 %v553, 1
    %vm559 = vcmp.gt.s32.totalorder %v558, 0
    %v560 = vsel %vm559, %v558, 0
    %v561 = vshrl.u32 %v560, 5
    %v562 = vand.u32 %v560, 31
    %v563 = vsub.s32 32, %v562
    %v564 = vshrl.u32 683565275, %v563
    %v565 = vshll.u32 683565275, %v562
    %v566 = vshrl.u32 2475754826, %v563
    %v567 = vor.u32 %v565, %v566
    %v568 = vshll.u32 2475754826, %v562
    %v569 = vshrl.u32 2131351028, %v563
    %v570 = vor.u32 %v568, %v569
    %v571 = vshll.u32 2131351028, %v562
    %v572 = vshrl.u32 2102212464, %v563
    %v573 = vor.u32 %v571, %v572
    %v574 = vshll.u32 2102212464, %v562
    %v575 = vshrl.u32 920167782, %v563
    %v576 = vor.u32 %v574, %v575
    %v577 = vshll.u32 920167782, %v562
    %v578 = vshrl.u32 1326507024, %v563
    %v579 = vor.u32 %v577, %v578
    %vm580 = vcmp.lt.s32.totalorder %v561, 1
    %vm581 = vcmp.lt.s32.totalorder %v561, 2
    %vm582 = vcmp.lt.s32.totalorder %v561, 3
    %vm583 = vcmp.lt.s32.totalorder %v561, 4
    %v584 = vsel %vm580, %v564, %v567
    %v585 = vsel %vm583, %v573, 2102212464
    %v586 = vsel %vm582, %v570, %v585
    %v587 = vsel %vm581, %v584, %v586
    %v588 = vsel %vm580, %v567, %v570
    %v589 = vsel %vm583, %v576, 920167782
    %v590 = vsel %vm582, %v573, %v589
    %v591 = vsel %vm581, %v588, %v590
    %v592 = vsel %vm580, %v570, %v573
    %v593 = vsel %vm583, %v579, 1326507024
    %v594 = vsel %vm582, %v576, %v593
    %v595 = vsel %vm581, %v592, %v594
    %v596 = vshll.u32 %v556, 8
    %v597 = vmul.u32.u64.compose %v596, %v595
    %v598 = vextract.low.u32 %v597
    %v599 = vextract.high.u32 %v597
    %v600 = vmul.u32.u64.compose %v596, %v591
    %v601 = vextract.low.u32 %v600
    %v602 = vextract.high.u32 %v600
    %v603 = vmul.u32 %v596, %v587
    %v604 = vadd.s32 %v599, %v601
    %vm605 = vc.u32 %v599, %v601
    %v606 = vadd.s32 %v602, 1
    %v607 = vsel %vm605, %v606, %v602
    %v608 = vadd.s32 %v603, %v607
    %v609 = vadd.s32 %v608, 536870912
    %v610 = vshrl.u32 %v609, 30
    %v611 = vshll.u32 %v610, 30
    %v612 = vsub.s32 %v608, %v611
    %vm613 = vcmp.lt.s32.totalorder %v612, 0
    %v614 = vsub.s32 0, %v612
    %v615 = vsel %vm613, %v614, %v612
    %v616 = vclz %v615
    %v617 = vsub.s32 %v616, 2
    %vm618 = vcmp.gt.s32.totalorder 0, %v617
    %v619 = vsel %vm618, 0, %v617
    %v620 = vsub.s32 32, %v619
    %v621 = vshll.u32 %v612, %v619
    %v622 = vshrl.u32 %v604, %v620
    %v623 = vor.u32 %v621, %v622
    %v624 = vsub.s32 4294967266, %v619
    %v625 = vadd.s32 %v624, 127
    %v626 = vshll.u32 %v625, 23
    %v627 = vor.u32 4788187, %v626
    %v628 = vand.u32 2147483647, %v627
    %v630 = vcvt.s32.f32 %v623
    %v631 = vmul.f32 %v630, %v628
    %v632 = vxor.u32 %v631, 2147483648
    %v633 = vsel %vm550, %v632, %v631
    %v634 = vsub.s32 4, %v610
    %v635 = vsel %vm550, %v634, %v610
    %v636 = vsel %vm549, %v442, %v633
    %v637 = vsel %vm549, 0, %v635
    %v638 = vcosq.f32.pop %v636
    %v639 = vsinq.f32.pop %v636
    %vm640 = vweird.f32 %v442
    %v641 = vand.u32 %v637, 3
    %vm642 = vcmp.lt.s32.totalorder %v641, 2
    %vm643 = vcmp.eq.s32.totalorder %v641, 0
    %v644 = vxor.u32 %v639, 2147483648
    %v645 = vsel %vm643, %v638, %v644
    %vm646 = vcmp.eq.s32.totalorder %v641, 2
    %v647 = vxor.u32 %v638, 2147483648
    %v648 = vsel %vm646, %v647, %v639
    %v649 = vsel %vm642, %v645, %v648
    %v650 = vsel %vm640, nan, %v649
    %651 = vst [vmem:[#allocation5 + $0x12] sm:$0x7] %v650
    %v652 = vmul.f32 %v21, 8.0
    %v653 = vand.u32 2147483647, %v652
    %vm654 = vcmp.le.f32.partialorder %v653, 0.7853982
    %vm655 = vcmp.lt.s32.totalorder %v652, 0
    %v656 = vand.u32 %v652, 2139095040
    %v657 = vshrl.u32 %v656, 23
    %v658 = vsub.s32 %v657, 127
    %v659 = vand.u32 2147483647, %v652
    %v660 = vand.u32 %v659, 8388607
    %v661 = vor.u32 %v660, 8388608
    %v662 = vsub.s32 0, %v661
    %v663 = vadd.s32 %v658, 1
    %vm664 = vcmp.gt.s32.totalorder %v663, 0
    %v665 = vsel %vm664, %v663, 0
    %v666 = vshrl.u32 %v665, 5
    %v667 = vand.u32 %v665, 31
    %v668 = vsub.s32 32, %v667
    %v669 = vshrl.u32 683565275, %v668
    %v670 = vshll.u32 683565275, %v667
    %v671 = vshrl.u32 2475754826, %v668
    %v672 = vor.u32 %v670, %v671
    %v673 = vshll.u32 2475754826, %v667
    %v674 = vshrl.u32 2131351028, %v668
    %v675 = vor.u32 %v673, %v674
    %v676 = vshll.u32 2131351028, %v667
    %v677 = vshrl.u32 2102212464, %v668
    %v678 = vor.u32 %v676, %v677
    %v679 = vshll.u32 2102212464, %v667
    %v680 = vshrl.u32 920167782, %v668
    %v681 = vor.u32 %v679, %v680
    %v682 = vshll.u32 920167782, %v667
    %v683 = vshrl.u32 1326507024, %v668
    %v684 = vor.u32 %v682, %v683
    %vm685 = vcmp.lt.s32.totalorder %v666, 1
    %vm686 = vcmp.lt.s32.totalorder %v666, 2
    %vm687 = vcmp.lt.s32.totalorder %v666, 3
    %vm688 = vcmp.lt.s32.totalorder %v666, 4
    %v689 = vsel %vm685, %v669, %v672
    %v690 = vsel %vm688, %v678, 2102212464
    %v691 = vsel %vm687, %v675, %v690
    %v692 = vsel %vm686, %v689, %v691
    %v693 = vsel %vm685, %v672, %v675
    %v694 = vsel %vm688, %v681, 920167782
    %v695 = vsel %vm687, %v678, %v694
    %v696 = vsel %vm686, %v693, %v695
    %v697 = vsel %vm685, %v675, %v678
    %v698 = vsel %vm688, %v684, 1326507024
    %v699 = vsel %vm687, %v681, %v698
    %v700 = vsel %vm686, %v697, %v699
    %v701 = vshll.u32 %v661, 8
    %v702 = vmul.u32.u64.compose %v701, %v700
    %v703 = vextract.low.u32 %v702
    %v704 = vextract.high.u32 %v702
    %v705 = vmul.u32.u64.compose %v701, %v696
    %v706 = vextract.low.u32 %v705
    %v707 = vextract.high.u32 %v705
    %v708 = vmul.u32 %v701, %v692
    %v709 = vadd.s32 %v704, %v706
    %vm710 = vc.u32 %v704, %v706
    %v711 = vadd.s32 %v707, 1
    %v712 = vsel %vm710, %v711, %v707
    %v713 = vadd.s32 %v708, %v712
    %v714 = vadd.s32 %v713, 536870912
    %v715 = vshrl.u32 %v714, 30
    %v716 = vshll.u32 %v715, 30
    %v717 = vsub.s32 %v713, %v716
    %vm718 = vcmp.lt.s32.totalorder %v717, 0
    %v719 = vsub.s32 0, %v717
    %v720 = vsel %vm718, %v719, %v717
    %v721 = vclz %v720
    %v722 = vsub.s32 %v721, 2
    %vm723 = vcmp.gt.s32.totalorder 0, %v722
    %v724 = vsel %vm723, 0, %v722
    %v725 = vsub.s32 32, %v724
    %v726 = vshll.u32 %v717, %v724
    %v727 = vshrl.u32 %v709, %v725
    %v728 = vor.u32 %v726, %v727
    %v729 = vsub.s32 4294967266, %v724
    %v730 = vadd.s32 %v729, 127
    %v731 = vshll.u32 %v730, 23
    %v732 = vor.u32 4788187, %v731
    %v733 = vand.u32 2147483647, %v732
    %v735 = vcvt.s32.f32 %v728
    %v736 = vmul.f32 %v735, %v733
    %v737 = vxor.u32 %v736, 2147483648
    %v738 = vsel %vm655, %v737, %v736
    %v739 = vsub.s32 4, %v715
    %v740 = vsel %vm655, %v739, %v715
    %v741 = vsel %vm654, %v652, %v738
    %v742 = vsel %vm654, 0, %v740
    %v743 = vcosq.f32.pop %v741
    %v744 = vsinq.f32.pop %v741
    %vm745 = vweird.f32 %v652
    %v746 = vadd.s32 %v742, 3
    %v747 = vand.u32 %v746, 3
    %vm748 = vcmp.lt.s32.totalorder %v747, 2
    %vm749 = vcmp.eq.s32.totalorder %v747, 0
    %v750 = vxor.u32 %v744, 2147483648
    %v751 = vsel %vm749, %v743, %v750
    %vm752 = vcmp.eq.s32.totalorder %v747, 2
    %v753 = vxor.u32 %v743, 2147483648
    %v754 = vsel %vm752, %v753, %v744
    %v755 = vsel %vm748, %v751, %v754
    %v756 = vsel %vm745, nan, %v755
    %757 = vst [vmem:[#allocation5 + $0x15] sm:$0x7] %v756
    %v758 = vand.u32 2147483647, %v652
    %vm759 = vcmp.le.f32.partialorder %v758, 0.7853982
    %vm760 = vcmp.lt.s32.totalorder %v652, 0
    %v761 = vand.u32 %v652, 2139095040
    %v762 = vshrl.u32 %v761, 23
    %v763 = vsub.s32 %v762, 127
    %v764 = vand.u32 2147483647, %v652
    %v765 = vand.u32 %v764, 8388607
    %v766 = vor.u32 %v765, 8388608
    %v767 = vsub.s32 0, %v766
    %v768 = vadd.s32 %v763, 1
    %vm769 = vcmp.gt.s32.totalorder %v768, 0
    %v770 = vsel %vm769, %v768, 0
    %v771 = vshrl.u32 %v770, 5
    %v772 = vand.u32 %v770, 31
    %v773 = vsub.s32 32, %v772
    %v774 = vshrl.u32 683565275, %v773
    %v775 = vshll.u32 683565275, %v772
    %v776 = vshrl.u32 2475754826, %v773
    %v777 = vor.u32 %v775, %v776
    %v778 = vshll.u32 2475754826, %v772
    %v779 = vshrl.u32 2131351028, %v773
    %v780 = vor.u32 %v778, %v779
    %v781 = vshll.u32 2131351028, %v772
    %v782 = vshrl.u32 2102212464, %v773
    %v783 = vor.u32 %v781, %v782
    %v784 = vshll.u32 2102212464, %v772
    %v785 = vshrl.u32 920167782, %v773
    %v786 = vor.u32 %v784, %v785
    %v787 = vshll.u32 920167782, %v772
    %v788 = vshrl.u32 1326507024, %v773
    %v789 = vor.u32 %v787, %v788
    %vm790 = vcmp.lt.s32.totalorder %v771, 1
    %vm791 = vcmp.lt.s32.totalorder %v771, 2
    %vm792 = vcmp.lt.s32.totalorder %v771, 3
    %vm793 = vcmp.lt.s32.totalorder %v771, 4
    %v794 = vsel %vm790, %v774, %v777
    %v795 = vsel %vm793, %v783, 2102212464
    %v796 = vsel %vm792, %v780, %v795
    %v797 = vsel %vm791, %v794, %v796
    %v798 = vsel %vm790, %v777, %v780
    %v799 = vsel %vm793, %v786, 920167782
    %v800 = vsel %vm792, %v783, %v799
    %v801 = vsel %vm791, %v798, %v800
    %v802 = vsel %vm790, %v780, %v783
    %v803 = vsel %vm793, %v789, 1326507024
    %v804 = vsel %vm792, %v786, %v803
    %v805 = vsel %vm791, %v802, %v804
    %v806 = vshll.u32 %v766, 8
    %v807 = vmul.u32.u64.compose %v806, %v805
    %v808 = vextract.low.u32 %v807
    %v809 = vextract.high.u32 %v807
    %v810 = vmul.u32.u64.compose %v806, %v801
    %v811 = vextract.low.u32 %v810
    %v812 = vextract.high.u32 %v810
    %v813 = vmul.u32 %v806, %v797
    %v814 = vadd.s32 %v809, %v811
    %vm815 = vc.u32 %v809, %v811
    %v816 = vadd.s32 %v812, 1
    %v817 = vsel %vm815, %v816, %v812
    %v818 = vadd.s32 %v813, %v817
    %v819 = vadd.s32 %v818, 536870912
    %v820 = vshrl.u32 %v819, 30
    %v821 = vshll.u32 %v820, 30
    %v822 = vsub.s32 %v818, %v821
    %vm823 = vcmp.lt.s32.totalorder %v822, 0
    %v824 = vsub.s32 0, %v822
    %v825 = vsel %vm823, %v824, %v822
    %v826 = vclz %v825
    %v827 = vsub.s32 %v826, 2
    %vm828 = vcmp.gt.s32.totalorder 0, %v827
    %v829 = vsel %vm828, 0, %v827
    %v830 = vsub.s32 32, %v829
    %v831 = vshll.u32 %v822, %v829
    %v832 = vshrl.u32 %v814, %v830
    %v833 = vor.u32 %v831, %v832
    %v834 = vsub.s32 4294967266, %v829
    %v835 = vadd.s32 %v834, 127
    %v836 = vshll.u32 %v835, 23
    %v837 = vor.u32 4788187, %v836
    %v838 = vand.u32 2147483647, %v837
    %v840 = vcvt.s32.f32 %v833
    %v841 = vmul.f32 %v840, %v838
    %v842 = vxor.u32 %v841, 2147483648
    %v843 = vsel %vm760, %v842, %v841
    %v844 = vsub.s32 4, %v820
    %v845 = vsel %vm760, %v844, %v820
    %v846 = vsel %vm759, %v652, %v843
    %v847 = vsel %vm759, 0, %v845
    %v848 = vcosq.f32.pop %v846
    %v849 = vsinq.f32.pop %v846
    %vm850 = vweird.f32 %v652
    %v851 = vand.u32 %v847, 3
    %vm852 = vcmp.lt.s32.totalorder %v851, 2
    %vm853 = vcmp.eq.s32.totalorder %v851, 0
    %v854 = vxor.u32 %v849, 2147483648
    %v855 = vsel %vm853, %v848, %v854
    %vm856 = vcmp.eq.s32.totalorder %v851, 2
    %v857 = vxor.u32 %v848, 2147483648
    %v858 = vsel %vm856, %v857, %v849
    %v859 = vsel %vm852, %v855, %v858
    %v860 = vsel %vm850, nan, %v859
    %861 = vst [vmem:[#allocation5 + $0x18] sm:$0x7] %v860
    // Predicated region
    $region10: #{tpu_custom_call.1} parent=1 // pred_check
      _
    $region11: #{tpu_custom_call.1} parent=1 // pred_check_branch
      %863 = sbr.rel (0) target = $region13
    $region12: #{tpu_custom_call.1} parent=1 // pred_region
      %s865 = ssub.s32 512, 512
      %866 = vsyncadd [#allocation4], %s865
      %s867 = sshll.u32 [#allocation5], 4
      %s868 = int_to_ptr.vmem [resolvable:$true] %s867
      %873 = dma.vmem_to_hbm [thread:$0]  %s868, 512, %s1, [#allocation4], 128, 128, 8
    $region13: #{tpu_custom_call.1} parent=1 // pred_fallthru
      _
    // Predicated region
    $region14: #{tpu_custom_call.1} parent=1 // pred_check
      _
    $region15: #{tpu_custom_call.1} parent=1 // pred_check_branch
      %875 = sbr.rel (0) target = $region17
    $region16: #{tpu_custom_call.1} parent=1 // pred_region
      %876 = dma.done [#allocation4], 512
    $region17: #{tpu_custom_call.1} parent=1 // pred_fallthru
      _
    %877 = vsyncpa [#allocation3], 1
    %878 = vsyncpa [#allocation4], 1

</llo_original>
